<compile_context>
chip_gen: v5e
topology: v5e:2x2
jax: 0.10.0
libtpu: 0.0.40
codegen_flags: <defaults>
</compile_context>

<pallas_src>
import functools

import jax
import jax.numpy as jnp
from jax.experimental import pallas as pl
from jax.experimental.pallas import tpu as pltpu

MARGIN = 0.0  # module default

# Widest multiple-of-128 lane width that exactly divides the flat size
# (free, contiguous reshape; lane-dense output blocks).
_LANE_CANDIDATES = (1024, 896, 768, 640, 512, 384, 256, 128)

# ~4 MiB of f32 per input block.  Double-buffered footprint:
#   3 arrays * 2 buffers * 4 MiB = 24 MiB  (< 32 MiB default scoped VMEM on
# v6e/v7x; vmem_limit_bytes below covers v5e's 16 MiB default).
_TARGET_BLOCK_ELEMS = 1024 * 1024

# Below this many elements a single block is fine; above it we force >= 2
# blocks so megacore sharding and DMA/compute overlap are not lost.
_SINGLE_BLOCK_MAX_ELEMS = 64 * 1024


def _bce_margin_kernel_fused(x_ref, y_ref, o_ref, *, margin):
    # Requires margin >= 0 (positive/negative masks are disjoint), which holds
    # for the module default.  Single selected relu branch -> fewer VALU ops.
    x = x_ref[...].astype(jnp.float32)
    y = y_ref[...].astype(jnp.float32)
    # bce(x,y) and bce(-x,-y) share softplus(-|x|) - x*y: one exp + one log1p.
    common = jnp.log1p(jnp.exp(-jnp.abs(x))) - x * y
    xs = jnp.where(y > margin, x, -x)          # x for the pos branch, -x for neg
    gate = jnp.abs(y) > margin                 # pos OR neg mask
    loss = jnp.where(gate, common + jnp.maximum(xs, 0.0), jnp.zeros_like(x))
    o_ref[...] = loss.astype(o_ref.dtype)


def _bce_margin_kernel_general(x_ref, y_ref, o_ref, *, margin):
    # General form for margin < 0 (masks may overlap -> sum both branches).
    x = x_ref[...].astype(jnp.float32)
    y = y_ref[...].astype(jnp.float32)
    common = jnp.log1p(jnp.exp(-jnp.abs(x))) - x * y
    zero = jnp.zeros_like(x)
    pos = jnp.where(y > margin, common + jnp.maximum(x, 0.0), zero)
    neg = jnp.where(y < -margin, common + jnp.maximum(-x, 0.0), zero)
    o_ref[...] = (pos + neg).astype(o_ref.dtype)


def _elementwise_jnp(x, y, margin):
    """Plain-XLA elementwise loss (tail path + test reference)."""
    x = x.astype(jnp.float32)
    y = y.astype(jnp.float32)

    def bce(xx, yy):
        return jnp.maximum(xx, 0.0) - xx * yy + jnp.log1p(jnp.exp(-jnp.abs(xx)))

    pos = (y > margin).astype(jnp.float32)
    neg = (y < -margin).astype(jnp.float32)
    return pos * bce(x, y) + neg * bce(-x, -y)


def _run_kernel(x_flat, y_flat, margin, out_dtype, lane_w=None):
    n = x_flat.shape[0]
    if lane_w is None:
        lane_w = next(w for w in _LANE_CANDIDATES if n % w == 0)

    rows = n // lane_w
    x2 = x_flat.reshape(rows, lane_w)
    y2 = y_flat.reshape(rows, lane_w)

    if n <= _SINGLE_BLOCK_MAX_ELEMS or rows <= 8:
        # Small tensor: single full-array block (any size allowed).
        row_tile = rows
    else:
        # Capped lane-dense block, row_tile a multiple of 8 (ragged final
        # block handled by Pallas masked writes).
        row_tile = max(8, (_TARGET_BLOCK_ELEMS // lane_w) // 8 * 8)
        if row_tile >= rows:
            # Medium tensor: never collapse to grid=(1,) -- split into >= 2
            # (target ~4) blocks so both v7x TCs and the pipeline stay busy.
            per_block = pl.cdiv(rows, 4)
            row_tile = max(8, pl.cdiv(per_block, 8) * 8)

    grid = (pl.cdiv(rows, row_tile),)

    kernel_body = (_bce_margin_kernel_fused if margin >= 0
                   else _bce_margin_kernel_general)
    kernel = functools.partial(kernel_body, margin=float(margin))

    cost = pl.CostEstimate(
        flops=12 * n,
        transcendentals=2 * n,
        bytes_accessed=n * (x2.dtype.itemsize + y2.dtype.itemsize
                            + jnp.dtype(out_dtype).itemsize),
    )

    out2 = pl.pallas_call(
        kernel,
        out_shape=jax.ShapeDtypeStruct((rows, lane_w), out_dtype),
        grid_spec=pltpu.PrefetchScalarGridSpec(
            num_scalar_prefetch=0,
            grid=grid,
            in_specs=[
                pl.BlockSpec((row_tile, lane_w), lambda i: (i, 0)),
                pl.BlockSpec((row_tile, lane_w), lambda i: (i, 0)),
            ],
            out_specs=pl.BlockSpec((row_tile, lane_w), lambda i: (i, 0)),
        ),
        compiler_params=pltpu.CompilerParams(
            dimension_semantics=("parallel",),
            vmem_limit_bytes=64 << 20,
        ),
        cost_estimate=cost,
    )(x2, y2)
    return out2.reshape(-1)


def bce_margin_loss(inputs, targets, margin=MARGIN):
    """Elementwise margin-gated BCE-with-logits loss (reduce=None path)."""
    assert inputs.shape == targets.shape
    orig_shape = inputs.shape
    out_dtype = (inputs.dtype if jnp.issubdtype(inputs.dtype, jnp.floating)
                 else jnp.float32)

    n = inputs.size
    x_flat = inputs.reshape(-1)
    y_flat = targets.reshape(-1)

    lane_w = next((w for w in _LANE_CANDIDATES if n % w == 0), None)

    if lane_w is not None:
        out = _run_kernel(x_flat, y_flat, margin, out_dtype, lane_w=lane_w)
        return out.reshape(orig_shape)

    # n not a multiple of 128: run the kernel on the 128-aligned prefix and do
    # the (<128 element) tail in plain XLA -- avoids a full pad/slice copy.
    n_main = (n // 128) * 128
    if n_main == 0:
        out = _elementwise_jnp(x_flat, y_flat, margin).astype(out_dtype)
        return out.reshape(orig_shape)
    main = _run_kernel(x_flat[:n_main], y_flat[:n_main], margin, out_dtype)
    tail = _elementwise_jnp(x_flat[n_main:], y_flat[n_main:],
                            margin).astype(out_dtype)
    return jnp.concatenate([main, tail]).reshape(orig_shape)


if __name__ == "__main__":
    key = jax.random.PRNGKey(0)
    k1, k2 = jax.random.split(key)

    # NCHW, small shapes: batch=2, channels=4, spatial=16x16
    x = jax.random.normal(k1, (2, 4, 16, 16), dtype=jnp.float32)
    # Targets in [-1, 1] so both positive and negative branches are exercised.
    t = jax.random.uniform(k2, (2, 4, 16, 16), dtype=jnp.float32,
                           minval=-1.0, maxval=1.0)

    out = bce_margin_loss(x, t)
    out = jax.block_until_ready(out)

    ref = _elementwise_jnp(x, t, MARGIN)
    assert out.shape == x.shape
    assert out.dtype == x.dtype
    assert jnp.allclose(out.astype(jnp.float32), ref, atol=1e-5, rtol=1e-5)

    print("KERNEL_OK")
</pallas_src>

<mosaic_0001>
module attributes {stable_mosaic.version = 11 : i64} {
  func.func @_bce_margin_kernel_fused(%arg0: i32, %arg1: memref<2x1024xf32, #tpu.memory_space<vmem>>, %arg2: memref<2x1024xf32, #tpu.memory_space<vmem>>, %arg3: memref<2x1024xf32, #tpu.memory_space<vmem>>) attributes {dimension_semantics = [#tpu.dimension_semantics<parallel>], iteration_bounds = array<i64: 1>, scalar_prefetch = 0 : i64, scratch_operands = 0 : i64, tpu.core_type = #tpu.core_type<tc>, window_params = [{transform_indices = @transform_0, window_bounds = array<i64: 2, 1024>}, {transform_indices = @transform_1, window_bounds = array<i64: 2, 1024>}, {transform_indices = @transform_2, window_bounds = array<i64: 2, 1024>}]} {
    %c0 = arith.constant 0 : index
    %c0_0 = arith.constant 0 : index
    %0 = vector.load %arg1[%c0, %c0_0] : memref<2x1024xf32, #tpu.memory_space<vmem>>, vector<2x1024xf32>
    %c0_1 = arith.constant 0 : index
    %c0_2 = arith.constant 0 : index
    %1 = vector.load %arg2[%c0_1, %c0_2] : memref<2x1024xf32, #tpu.memory_space<vmem>>, vector<2x1024xf32>
    %2 = math.absf %0 : vector<2x1024xf32>
    %cst = arith.constant 0.000000e+00 : f32
    %3 = vector.broadcast %cst : f32 to vector<2x1024xf32>
    %4 = arith.subf %3, %2 : vector<2x1024xf32>
    %5 = math.exp %4 : vector<2x1024xf32>
    %6 = math.log1p %5 : vector<2x1024xf32>
    %7 = arith.mulf %0, %1 : vector<2x1024xf32>
    %8 = arith.subf %6, %7 : vector<2x1024xf32>
    %cst_3 = arith.constant 0.000000e+00 : f32
    %9 = vector.broadcast %cst_3 : f32 to vector<2x1024xf32>
    %10 = arith.cmpf ogt, %1, %9 : vector<2x1024xf32>
    %cst_4 = arith.constant 0.000000e+00 : f32
    %11 = vector.broadcast %cst_4 : f32 to vector<2x1024xf32>
    %12 = arith.subf %11, %0 : vector<2x1024xf32>
    %13 = arith.select %10, %0, %12 : vector<2x1024xi1>, vector<2x1024xf32>
    %14 = math.absf %1 : vector<2x1024xf32>
    %cst_5 = arith.constant 0.000000e+00 : f32
    %15 = vector.broadcast %cst_5 : f32 to vector<2x1024xf32>
    %16 = arith.cmpf ogt, %14, %15 : vector<2x1024xf32>
    %cst_6 = arith.constant 0.000000e+00 : f32
    %17 = vector.broadcast %cst_6 : f32 to vector<2x1024xf32>
    %18 = arith.maximumf %13, %17 : vector<2x1024xf32>
    %19 = arith.addf %8, %18 : vector<2x1024xf32>
    %cst_7 = arith.constant 0.000000e+00 : f32
    %20 = vector.broadcast %cst_7 : f32 to vector<2x1024xf32>
    %21 = arith.select %16, %19, %20 : vector<2x1024xi1>, vector<2x1024xf32>
    %c0_8 = arith.constant 0 : index
    %c0_9 = arith.constant 0 : index
    %22 = vector.load %arg3[%c0_8, %c0_9] : memref<2x1024xf32, #tpu.memory_space<vmem>>, vector<2x1024xf32>
    tpu.vector_store %arg3[%c0_8, %c0_9], %21 {strides = array<i32>} : memref<2x1024xf32, #tpu.memory_space<vmem>>, vector<2x1024xf32>,
    return
  }
  func.func @transform_0(%arg0: i32) -> (i32, i32) {
    %c0_i32 = arith.constant 0 : i32
    %c0_i32_0 = arith.constant 0 : i32
    return %arg0, %c0_i32 : i32, i32
  }
  func.func @transform_1(%arg0: i32) -> (i32, i32) {
    %c0_i32 = arith.constant 0 : i32
    %c0_i32_0 = arith.constant 0 : i32
    return %arg0, %c0_i32 : i32, i32
  }
  func.func @transform_2(%arg0: i32) -> (i32, i32) {
    %c0_i32 = arith.constant 0 : i32
    %c0_i32_0 = arith.constant 0 : i32
    return %arg0, %c0_i32 : i32, i32
  }
}

</mosaic_0001>

<llo_original>
// kernel: tpu_custom_call.1
$region0: #{tpu_custom_call.1}
  #allocation0 [shape = 'u32[]', space=smem, size = 0x4, offset = 0x4, fixed_abs, tag = 'smem constant byte address 0x4 - core index']
  #allocation1 [shape = 'u32[72,128]{1,0:T(1,128)}', space=vmem, size = 0x9000, scoped, tag = 'internal scratch']
  %s0 = inlined_call_operand.hbm [shape: f32[2,1024], index: 0, kind: input, shape index: {}]
  %s1 = inlined_call_operand.hbm [shape: f32[2,1024], index: 1, kind: input, shape index: {}]
  %s2 = inlined_call_operand.hbm [shape: f32[2,1024], index: 2, kind: output, shape index: {}]
  %s3 = sld [smem:[#allocation0]]
  $region26: #{tpu_custom_call.1} parent=0
    _
  %s5 = ssub.s32 1, %s3
  %s6 = scalar_select 0, %s5, %s3
  $region1: #{tpu_custom_call.1} parent=0
    #allocation2 [shape = 'u8[8192]{0}', space=vmem, size = 0x2000, scoped, tag = 'input window, operand 0, single buffered']
    #allocation3 [shape = 's32[1]{0}', space=sflag, size = 0x4, scoped, tag = 'scoped memory for tpu_custom_call.1']
    #allocation4 [shape = 's32[1]{0}', space=sflag, size = 0x4, scoped, tag = 'scoped memory for tpu_custom_call.1']
    #allocation5 [shape = 'u8[8192]{0}', space=vmem, size = 0x2000, scoped, tag = 'input window, operand 1, single buffered']
    #allocation6 [shape = 's32[1]{0}', space=sflag, size = 0x4, scoped, tag = 'scoped memory for tpu_custom_call.1']
    #allocation7 [shape = 'u8[8192]{0}', space=vmem, size = 0x2000, scoped, tag = 'output window, operand 0, single buffered']
    %7 = vsyncpa [#allocation3], 0
    %8 = vsyncpa [#allocation6], 0
    %9 = vsyncpa [#allocation4], 0
    // Predicated region
    $region2: #{tpu_custom_call.1} parent=1 // pred_check
      _
    $region3: #{tpu_custom_call.1} parent=1 // pred_check_branch
      %11 = sbr.rel (0) target = $region5
    $region4: #{tpu_custom_call.1} parent=1 // pred_region
      %13 = vsyncadd [#allocation3], 0
      %s15 = sshll.u32 %s0, 4
      %s16 = int_to_ptr.hbm [resolvable:$true] %s15
      %s17 = sshll.u32 [#allocation2], 4
      %s18 = int_to_ptr.vmem [resolvable:$true] %s17
      %20 = dma.hbm_to_vmem [thread:$0]  %s16, 256, %s18, [#allocation3]
    $region5: #{tpu_custom_call.1} parent=1 // pred_fallthru
      _
    // Predicated region
    $region6: #{tpu_custom_call.1} parent=1 // pred_check
      _
    $region7: #{tpu_custom_call.1} parent=1 // pred_check_branch
      %22 = sbr.rel (0) target = $region9
    $region8: #{tpu_custom_call.1} parent=1 // pred_region
      %24 = vsyncadd [#allocation6], 0
      %s26 = sshll.u32 %s1, 4
      %s27 = int_to_ptr.hbm [resolvable:$true] %s26
      %s28 = sshll.u32 [#allocation5], 4
      %s29 = int_to_ptr.vmem [resolvable:$true] %s28
      %31 = dma.hbm_to_vmem [thread:$0]  %s27, 256, %s29, [#allocation6]
    $region9: #{tpu_custom_call.1} parent=1 // pred_fallthru
      _
    // Predicated region
    $region10: #{tpu_custom_call.1} parent=1 // pred_check
      _
    $region11: #{tpu_custom_call.1} parent=1 // pred_check_branch
      %33 = sbr.rel (0) target = $region13
    $region12: #{tpu_custom_call.1} parent=1 // pred_region
      %35 = dma.done [#allocation3], 256
    $region13: #{tpu_custom_call.1} parent=1 // pred_fallthru
      _
    // Predicated region
    $region14: #{tpu_custom_call.1} parent=1 // pred_check
      _
    $region15: #{tpu_custom_call.1} parent=1 // pred_check_branch
      %37 = sbr.rel (0) target = $region17
    $region16: #{tpu_custom_call.1} parent=1 // pred_region
      %39 = dma.done [#allocation6], 256
    $region17: #{tpu_custom_call.1} parent=1 // pred_fallthru
      _
    %v40 = vld [vmem:[#allocation2] sm:$0xff]
    %v41 = vld [vmem:[#allocation2 + $0x8] sm:$0xff]
    %v42 = vld [vmem:[#allocation5] sm:$0xff]
    %v43 = vld [vmem:[#allocation5 + $0x8] sm:$0xff]
    %v44 = vand.u32 2147483647, %v40
    %v45 = vand.u32 2147483647, %v41
    %v46 = vsub.f32 0.0, %v44
    %v47 = vsub.f32 0.0, %v45
    %v48 = vmul.f32 %v46, 1.442695
    %v49 = vpow.pop %v48
    %v50 = vmul.f32 %v47, 1.442695
    %v51 = vpow.pop %v50
    %v52 = vadd.f32 %v49, 1.0
    %v53 = vlog2.pop %v52
    %v54 = vmul.f32 %v53, 0.6931472
    %v55 = vmul.f32 -0.5, %v49
    %v56 = vadd.f32 %v55, 1.0
    %v57 = vmul.f32 %v56, %v49
    %v58 = vand.u32 2147483647, %v49
    %vm59 = vcmp.lt.f32.partialorder %v58, 0.0004427343
    %v60 = vsel %vm59, %v57, %v54
    %v61 = vadd.f32 %v51, 1.0
    %v62 = vlog2.pop %v61
    %v63 = vmul.f32 %v62, 0.6931472
    %v64 = vmul.f32 -0.5, %v51
    %v65 = vadd.f32 %v64, 1.0
    %v66 = vmul.f32 %v65, %v51
    %v67 = vand.u32 2147483647, %v51
    %vm68 = vcmp.lt.f32.partialorder %v67, 0.0004427343
    %v69 = vsel %vm68, %v66, %v63
    %v70 = vmul.f32 %v40, %v42
    %v71 = vmul.f32 %v41, %v43
    %v72 = vsub.f32 %v60, %v70
    %v73 = vsub.f32 %v69, %v71
    %vm74 = vcmp.gt.f32.partialorder %v42, 0.0
    %vm75 = vcmp.gt.f32.partialorder %v43, 0.0
    %v76 = vsub.f32 0.0, %v40
    %v77 = vsub.f32 0.0, %v41
    %v78 = vsel %vm74, %v40, %v76
    %v79 = vsel %vm75, %v41, %v77
    %v80 = vand.u32 2147483647, %v42
    %v81 = vand.u32 2147483647, %v43
    %vm82 = vcmp.gt.f32.partialorder %v80, 0.0
    %vm83 = vcmp.gt.f32.partialorder %v81, 0.0
    %v84 = vmax.f32 %v78, 0.0
    %v85 = vmax.f32 %v79, 0.0
    %v86 = vadd.f32 %v72, %v84
    %v87 = vadd.f32 %v73, %v85
    %v88 = vsel %vm82, %v86, 0.0
    %v89 = vsel %vm83, %v87, 0.0
    %90 = vst [vmem:[#allocation7] sm:$0xff] %v88
    %91 = vst [vmem:[#allocation7 + $0x8] sm:$0xff] %v89
    // Predicated region
    $region18: #{tpu_custom_call.1} parent=1 // pred_check
      _
    $region19: #{tpu_custom_call.1} parent=1 // pred_check_branch
      %93 = sbr.rel (0) target = $region21
    $region20: #{tpu_custom_call.1} parent=1 // pred_region
      %95 = vsyncadd [#allocation4], 0
      %s97 = sshll.u32 [#allocation7], 4
      %s98 = int_to_ptr.vmem [resolvable:$true] %s97
      %s99 = sshll.u32 %s2, 4
      %s100 = int_to_ptr.hbm [resolvable:$true] %s99
      %102 = dma.vmem_to_hbm [thread:$0]  %s98, 256, %s100, [#allocation4]
    $region21: #{tpu_custom_call.1} parent=1 // pred_fallthru
      _
    // Predicated region
    $region22: #{tpu_custom_call.1} parent=1 // pred_check
      _
    $region23: #{tpu_custom_call.1} parent=1 // pred_check_branch
      %104 = sbr.rel (0) target = $region25
    $region24: #{tpu_custom_call.1} parent=1 // pred_region
      %106 = dma.done [#allocation4], 256
    $region25: #{tpu_custom_call.1} parent=1 // pred_fallthru
      _
    %107 = vsyncpa [#allocation3], 1
    %108 = vsyncpa [#allocation6], 1
    %109 = vsyncpa [#allocation4], 1

</llo_original>
